<compile_context>
chip_gen: v6e
topology: v6e:2x2x1
jax: 0.10.0
libtpu: 0.0.40
codegen_flags: <defaults>
</compile_context>

<pallas_src>
import functools

import jax
import jax.numpy as jnp
from jax.experimental import pallas as pl
from jax.experimental.pallas import tpu as pltpu


# ---------------------------------------------------------------------------
# Packed layouts
# ---------------------------------------------------------------------------
def _round_up(x, m):
    return ((x + m - 1) // m) * m


def _weight_layout(dim, hid):
    """Row offsets of each parameter inside the single (rows, 4*hid) f32 slab."""
    r_d = _round_up(dim, 8)
    r_h = _round_up(hid, 8)
    lay = {}
    lay["wx1"] = 0                       # W_ih1^T : (dim, 4H)
    lay["wh1"] = lay["wx1"] + r_d        # W_hh1^T : (H, 4H)
    lay["wx2"] = lay["wh1"] + r_h        # W_ih2^T : (H, 4H)
    lay["wh2"] = lay["wx2"] + r_h        # W_hh2^T : (H, 4H)
    lay["wlin"] = lay["wh2"] + r_h       # W_lin^T : (H, dim) zero-padded to 4H
    lay["b1"] = lay["wlin"] + r_h        # b_ih1 + b_hh1 (1 row, 8-row aligned)
    lay["b2"] = lay["b1"] + 8            # b_ih2 + b_hh2
    lay["blin"] = lay["b2"] + 8          # b_lin zero-padded to 4H
    lay["rows"] = lay["blin"] + 8
    return lay


def prepare_params(params):
    """One-time packing of all weights & biases into a single f32 VMEM slab.

    Weights stay f32 (no bf16 cast): at this size DMA bytes are irrelevant and
    f32 keeps parity with the PyTorch reference.
    """
    dim, hid = params["w_lin"].shape          # Linear(hid -> dim)
    gate_w = 4 * hid
    assert gate_w % 128 == 0, "4 * lstm_hidden_dim must be lane aligned (128)"
    assert dim <= gate_w, "dim must fit inside one gate-width lane block"
    lay = _weight_layout(dim, hid)

    w = jnp.zeros((lay["rows"], gate_w), jnp.float32)
    w = w.at[lay["wx1"]:lay["wx1"] + dim, :].set(params["w_ih1"].T)
    w = w.at[lay["wh1"]:lay["wh1"] + hid, :].set(params["w_hh1"].T)
    w = w.at[lay["wx2"]:lay["wx2"] + hid, :].set(params["w_ih2"].T)
    w = w.at[lay["wh2"]:lay["wh2"] + hid, :].set(params["w_hh2"].T)
    w = w.at[lay["wlin"]:lay["wlin"] + hid, 0:dim].set(params["w_lin"].T)
    w = w.at[lay["b1"], :].set(params["b_ih1"] + params["b_hh1"])
    w = w.at[lay["b2"], :].set(params["b_ih2"] + params["b_hh2"])
    w = w.at[lay["blin"], 0:dim].set(params["b_lin"])
    return w


def pack_state(lstm_input, hidden, cell):
    """Pack (x, hidden(2,1,H), cell(2,1,H)) -> (1, 8H) f32:
    [h0 | h1 | c0 | c1 | x | 0-pad]."""
    dim = lstm_input.shape[0]
    hid = hidden.shape[-1]
    sw = 8 * hid
    s = jnp.zeros((1, sw), jnp.float32)
    s = s.at[0, 0:hid].set(hidden[0, 0])
    s = s.at[0, hid:2 * hid].set(hidden[1, 0])
    s = s.at[0, 2 * hid:3 * hid].set(cell[0, 0])
    s = s.at[0, 3 * hid:4 * hid].set(cell[1, 0])
    s = s.at[0, 4 * hid:4 * hid + dim].set(lstm_input.astype(jnp.float32))
    return s


def unpack_state(state, dim, hid):
    """Packed (1, 8H) state -> (update (dim,), hidden (2,1,H), cell (2,1,H))."""
    h_out = jnp.stack([state[:, 0:hid], state[:, hid:2 * hid]])
    c_out = jnp.stack([state[:, 2 * hid:3 * hid], state[:, 3 * hid:4 * hid]])
    update = state[0, 4 * hid:4 * hid + dim]          # torch.squeeze -> (dim,)
    return update, h_out, c_out


# ---------------------------------------------------------------------------
# Kernel
# ---------------------------------------------------------------------------
def make_lstm_testobj_kernel(dim, hid):
    """Two stacked LSTMCells + final Linear, batch 1, fully VMEM-resident."""
    D, H = dim, hid
    G = 4 * hid                      # gate width = lane width of the slab
    lay = _weight_layout(dim, hid)

    def kernel(state_ref, w_ref, out_ref):
        # --- unpack recurrent state (static lane slices) ------------------
        h0 = state_ref[:, 0:H]
        h1 = state_ref[:, H:2 * H]
        c0 = state_ref[:, 2 * H:3 * H]
        c1 = state_ref[:, 3 * H:4 * H]
        x = state_ref[:, 4 * H:4 * H + D]

        def lstm_cell(xin, n_x, o_wx, hin, o_wh, cin, o_b):
            # Two independent MXU pushes (no xh concat on the critical path),
            # f32 accumulate.  PyTorch LSTMCell gate order: [i, f, g, o].
            gates = (jnp.dot(xin, w_ref[o_wx:o_wx + n_x, :],
                             preferred_element_type=jnp.float32)
                     + jnp.dot(hin, w_ref[o_wh:o_wh + H, :],
                               preferred_element_type=jnp.float32)
                     + w_ref[o_b:o_b + 1, :])                    # (1, 4H) f32
            # Full-vreg transcendentals on the EUP, then slice.
            sig = jax.nn.sigmoid(gates)
            th = jnp.tanh(gates)
            i_g = sig[:, 0 * H:1 * H]
            f_g = sig[:, 1 * H:2 * H]
            g_g = th[:, 2 * H:3 * H]
            o_g = sig[:, 3 * H:4 * H]
            c_new = f_g * cin + i_g * g_g
            h_new = o_g * jnp.tanh(c_new)
            return h_new, c_new

        h0n, c0n = lstm_cell(x, D, lay["wx1"], h0, lay["wh1"], c0, lay["b1"])
        h1n, c1n = lstm_cell(h0n, H, lay["wx2"], h1, lay["wh2"], c1, lay["b2"])

        # Final Linear over the padded (H, 4H) slab; lanes D:G are exact zeros
        # (zero weight columns + zero bias pad), so the pad lanes of the output
        # end up zeroed without an explicit fill.
        upd = (jnp.dot(h1n, w_ref[lay["wlin"]:lay["wlin"] + H, :],
                       preferred_element_type=jnp.float32)
               + w_ref[lay["blin"]:lay["blin"] + 1, :])          # (1, G) f32

        # Direct sub-slice stores (no concat chain on the critical path).
        out_ref[:, 0:H] = h0n
        out_ref[:, H:2 * H] = h1n
        out_ref[:, 2 * H:3 * H] = c0n
        out_ref[:, 3 * H:4 * H] = c1n
        out_ref[:, 4 * H:4 * H + G] = upd     # lane-aligned full-vreg store

    return kernel


def _packed_step_call(state, wslab, *, dim, hid):
    sw = 8 * hid
    vmem = pl.BlockSpec(memory_space=pltpu.MemorySpace.VMEM)
    return pl.pallas_call(
        make_lstm_testobj_kernel(dim, hid),
        out_shape=jax.ShapeDtypeStruct((1, sw), jnp.float32),
        in_specs=[vmem, vmem],
        out_specs=vmem,
        input_output_aliases={0: 0},        # packed state reused in place
    )(state, wslab)


# ---------------------------------------------------------------------------
# Wrappers
# ---------------------------------------------------------------------------
@functools.partial(jax.jit, static_argnames=("dim",), donate_argnums=(0,))
def lstm_testobj_step(state, wslab, *, dim):
    """Packed recurrent step: (1, 8H) state -> (1, 8H) new state, in place."""
    hid = state.shape[-1] // 8
    return _packed_step_call(state, wslab, dim=dim, hid=hid)


@jax.jit
def lstm_testobj_forward(lstm_input, hidden, cell, wslab):
    """PyTorch-API-compatible forward (learn_tele=False path).

    Returns (update: (dim,), hidden_out: (2,1,H), cell_out: (2,1,H)).
    """
    dim = lstm_input.shape[0]
    hid = hidden.shape[-1]
    state = pack_state(lstm_input, hidden, cell)
    new_state = _packed_step_call(state, wslab, dim=dim, hid=hid)
    return unpack_state(new_state, dim, hid)


# ---------------------------------------------------------------------------
# Reference (for verification) + synthetic init
# ---------------------------------------------------------------------------
def _reference_forward_f32(lstm_input, hidden, cell, params):
    """Pure-JAX f32 reference reproducing the PyTorch semantics exactly."""
    x = lstm_input[None, :]
    H = hidden.shape[-1]

    def cell_fn(xin, h, c, w_ih, w_hh, b_ih, b_hh):
        gates = xin @ w_ih.T + b_ih + h @ w_hh.T + b_hh
        i = jax.nn.sigmoid(gates[:, 0 * H:1 * H])
        f = jax.nn.sigmoid(gates[:, 1 * H:2 * H])
        g = jnp.tanh(gates[:, 2 * H:3 * H])
        o = jax.nn.sigmoid(gates[:, 3 * H:4 * H])
        c_new = f * c + i * g
        return o * jnp.tanh(c_new), c_new

    h0, c0 = cell_fn(x, hidden[0], cell[0],
                     params["w_ih1"], params["w_hh1"],
                     params["b_ih1"], params["b_hh1"])
    h1, c1 = cell_fn(h0, hidden[1], cell[1],
                     params["w_ih2"], params["w_hh2"],
                     params["b_ih2"], params["b_hh2"])
    update = jnp.squeeze(h1 @ params["w_lin"].T + params["b_lin"])
    return update, jnp.stack((h0, h1)), jnp.stack((c0, c1))


def _init_params(key, dim, H):
    """Deterministic synthetic init matching nn.LSTMCell / nn.Linear shapes."""
    ks = jax.random.split(key, 10)
    u = lambda k, shape, s: jax.random.uniform(k, shape, jnp.float32, -s, s)
    s1 = 1.0 / jnp.sqrt(H)
    return {
        # lstm1: LSTMCell(dim, H)
        "w_ih1": u(ks[0], (4 * H, dim), s1),
        "w_hh1": u(ks[1], (4 * H, H), s1),
        "b_ih1": u(ks[2], (4 * H,), s1),
        "b_hh1": u(ks[3], (4 * H,), s1),
        # lstm2: LSTMCell(H, H)
        "w_ih2": u(ks[4], (4 * H, H), s1),
        "w_hh2": u(ks[5], (4 * H, H), s1),
        "b_ih2": u(ks[6], (4 * H,), s1),
        "b_hh2": u(ks[7], (4 * H,), s1),
        # linear1: Linear(H, dim)
        "w_lin": u(ks[8], (dim, H), s1),
        "b_lin": u(ks[9], (dim,), s1),
    }


if __name__ == "__main__":
    DIM = 16          # parameter dimension ("dim" of LSTM_testobj)
    HID = 32          # lstm_hidden_dim  (4*HID = 128 gate lanes)

    key = jax.random.PRNGKey(0)
    k_p, k_x, k_h, k_c = jax.random.split(key, 4)

    params = _init_params(k_p, DIM, HID)
    wslab = prepare_params(params)                      # one-time weight pack
    lstm_input = jax.random.normal(k_x, (DIM,), jnp.float32)
    hidden = jax.random.normal(k_h, (2, 1, HID), jnp.float32)
    cell = jax.random.normal(k_c, (2, 1, HID), jnp.float32)

    # Tolerance note: weights are f32, but the MXU may run the f32 matmuls in
    # reduced-precision passes under default precision; 2e-2 is comfortably
    # above that numerical noise and far below any structural-bug error.
    ATOL = 2e-2

    # ---- Path 1: PyTorch-API-compatible forward ---------------------------
    update, h_out, c_out = jax.block_until_ready(
        lstm_testobj_forward(lstm_input, hidden, cell, wslab))
    assert update.shape == (DIM,)
    assert h_out.shape == (2, 1, HID) and c_out.shape == (2, 1, HID)

    ref_u, ref_h, ref_c = _reference_forward_f32(lstm_input, hidden, cell, params)
    assert jnp.allclose(update, ref_u, atol=ATOL, rtol=ATOL)
    assert jnp.allclose(h_out, ref_h, atol=ATOL, rtol=ATOL)
    assert jnp.allclose(c_out, ref_c, atol=ATOL, rtol=ATOL)

    # ---- Path 2: packed recurrent-state path (aliased, donated buffer) ----
    state0 = pack_state(lstm_input, hidden, cell)
    state1 = lstm_testobj_step(state0, wslab, dim=DIM)      # state0 donated
    u1, h1_, c1_ = unpack_state(state1, DIM, HID)
    assert jnp.allclose(u1, ref_u, atol=ATOL, rtol=ATOL)
    assert jnp.allclose(h1_, ref_h, atol=ATOL, rtol=ATOL)
    assert jnp.allclose(c1_, ref_c, atol=ATOL, rtol=ATOL)

    # Chain a second step in place (demo: feed step-1's update back as the
    # next lstm_input, exactly what the packed layout gives for free).
    ref2_u, ref2_h, ref2_c = _reference_forward_f32(ref_u, ref_h, ref_c, params)
    state2 = lstm_testobj_step(state1, wslab, dim=DIM)      # state1 donated
    u2, h2_, c2_ = unpack_state(state2, DIM, HID)
    jax.block_until_ready((u2, h2_, c2_))
    assert jnp.allclose(u2, ref2_u, atol=3e-2, rtol=3e-2)
    assert jnp.allclose(h2_, ref2_h, atol=3e-2, rtol=3e-2)
    assert jnp.allclose(c2_, ref2_c, atol=3e-2, rtol=3e-2)

    print("KERNEL_OK")
</pallas_src>

<mosaic_0001>
module attributes {stable_mosaic.version = 11 : i64} {
  func.func @kernel(%arg0: memref<1x256xf32, #tpu.memory_space<vmem>>, %arg1: memref<168x128xf32, #tpu.memory_space<vmem>>, %arg2: memref<1x256xf32, #tpu.memory_space<vmem>>) attributes {dimension_semantics = [], scalar_prefetch = 0 : i64, scratch_operands = 0 : i64, tpu.core_type = #tpu.core_type<tc>} {
    %c0 = arith.constant 0 : index
    %c0_0 = arith.constant 0 : index
    %0 = vector.load %arg0[%c0, %c0_0] : memref<1x256xf32, #tpu.memory_space<vmem>>, vector<1x32xf32>
    %c0_1 = arith.constant 0 : index
    %c32 = arith.constant 32 : index
    %1 = vector.load %arg0[%c0_1, %c32] : memref<1x256xf32, #tpu.memory_space<vmem>>, vector<1x32xf32>
    %c0_2 = arith.constant 0 : index
    %c64 = arith.constant 64 : index
    %2 = vector.load %arg0[%c0_2, %c64] : memref<1x256xf32, #tpu.memory_space<vmem>>, vector<1x32xf32>
    %c0_3 = arith.constant 0 : index
    %c96 = arith.constant 96 : index
    %3 = vector.load %arg0[%c0_3, %c96] : memref<1x256xf32, #tpu.memory_space<vmem>>, vector<1x32xf32>
    %c0_4 = arith.constant 0 : index
    %c128 = arith.constant 128 : index
    %4 = vector.load %arg0[%c0_4, %c128] : memref<1x256xf32, #tpu.memory_space<vmem>>, vector<1x16xf32>
    %c0_5 = arith.constant 0 : index
    %c0_6 = arith.constant 0 : index
    %5 = vector.load %arg1[%c0_5, %c0_6] : memref<168x128xf32, #tpu.memory_space<vmem>>, vector<16x128xf32>
    %cst = arith.constant dense<0.000000e+00> : vector<1x128xf32>
    %6 = tpu.matmul %4, %5, %cst {dimension_numbers = #tpu.dot_dimension_numbers<[1], [0], [0], [1], [0, 0, 1, 1], [], []>} : vector<1x16xf32>, vector<16x128xf32>, vector<1x128xf32> -> vector<1x128xf32>
    %c16 = arith.constant 16 : index
    %c0_7 = arith.constant 0 : index
    %7 = vector.load %arg1[%c16, %c0_7] : memref<168x128xf32, #tpu.memory_space<vmem>>, vector<32x128xf32>
    %cst_8 = arith.constant dense<0.000000e+00> : vector<1x128xf32>
    %8 = tpu.matmul %0, %7, %cst_8 {dimension_numbers = #tpu.dot_dimension_numbers<[1], [0], [0], [1], [0, 0, 1, 1], [], []>} : vector<1x32xf32>, vector<32x128xf32>, vector<1x128xf32> -> vector<1x128xf32>
    %9 = arith.addf %6, %8 : vector<1x128xf32>
    %c144 = arith.constant 144 : index
    %c0_9 = arith.constant 0 : index
    %10 = vector.load %arg1[%c144, %c0_9] : memref<168x128xf32, #tpu.memory_space<vmem>>, vector<1x128xf32>
    %11 = arith.addf %9, %10 : vector<1x128xf32>
    %12 = arith.negf %11 : vector<1x128xf32>
    %13 = math.exp %12 : vector<1x128xf32>
    %cst_10 = arith.constant 1.000000e+00 : f32
    %14 = vector.broadcast %cst_10 : f32 to vector<1x128xf32>
    %15 = arith.addf %14, %13 : vector<1x128xf32>
    %16 = arith.divf %14, %15 : vector<1x128xf32>
    %17 = math.tanh %11 : vector<1x128xf32>
    %18 = vector.extract_strided_slice %16 {offsets = [0, 0], sizes = [1, 32], strides = [1, 1]} : vector<1x128xf32> to vector<1x32xf32>
    %19 = vector.extract_strided_slice %16 {offsets = [0, 32], sizes = [1, 32], strides = [1, 1]} : vector<1x128xf32> to vector<1x32xf32>
    %20 = vector.extract_strided_slice %17 {offsets = [0, 64], sizes = [1, 32], strides = [1, 1]} : vector<1x128xf32> to vector<1x32xf32>
    %21 = vector.extract_strided_slice %16 {offsets = [0, 96], sizes = [1, 32], strides = [1, 1]} : vector<1x128xf32> to vector<1x32xf32>
    %22 = arith.mulf %19, %2 : vector<1x32xf32>
    %23 = arith.mulf %18, %20 : vector<1x32xf32>
    %24 = arith.addf %22, %23 : vector<1x32xf32>
    %25 = math.tanh %24 : vector<1x32xf32>
    %26 = arith.mulf %21, %25 : vector<1x32xf32>
    %c48 = arith.constant 48 : index
    %c0_11 = arith.constant 0 : index
    %27 = vector.load %arg1[%c48, %c0_11] : memref<168x128xf32, #tpu.memory_space<vmem>>, vector<32x128xf32>
    %cst_12 = arith.constant dense<0.000000e+00> : vector<1x128xf32>
    %28 = tpu.matmul %26, %27, %cst_12 {dimension_numbers = #tpu.dot_dimension_numbers<[1], [0], [0], [1], [0, 0, 1, 1], [], []>} : vector<1x32xf32>, vector<32x128xf32>, vector<1x128xf32> -> vector<1x128xf32>
    %c80 = arith.constant 80 : index
    %c0_13 = arith.constant 0 : index
    %29 = vector.load %arg1[%c80, %c0_13] : memref<168x128xf32, #tpu.memory_space<vmem>>, vector<32x128xf32>
    %cst_14 = arith.constant dense<0.000000e+00> : vector<1x128xf32>
    %30 = tpu.matmul %1, %29, %cst_14 {dimension_numbers = #tpu.dot_dimension_numbers<[1], [0], [0], [1], [0, 0, 1, 1], [], []>} : vector<1x32xf32>, vector<32x128xf32>, vector<1x128xf32> -> vector<1x128xf32>
    %31 = arith.addf %28, %30 : vector<1x128xf32>
    %c152 = arith.constant 152 : index
    %c0_15 = arith.constant 0 : index
    %32 = vector.load %arg1[%c152, %c0_15] : memref<168x128xf32, #tpu.memory_space<vmem>>, vector<1x128xf32>
    %33 = arith.addf %31, %32 : vector<1x128xf32>
    %34 = arith.negf %33 : vector<1x128xf32>
    %35 = math.exp %34 : vector<1x128xf32>
    %cst_16 = arith.constant 1.000000e+00 : f32
    %36 = vector.broadcast %cst_16 : f32 to vector<1x128xf32>
    %37 = arith.addf %36, %35 : vector<1x128xf32>
    %38 = arith.divf %36, %37 : vector<1x128xf32>
    %39 = math.tanh %33 : vector<1x128xf32>
    %40 = vector.extract_strided_slice %38 {offsets = [0, 0], sizes = [1, 32], strides = [1, 1]} : vector<1x128xf32> to vector<1x32xf32>
    %41 = vector.extract_strided_slice %38 {offsets = [0, 32], sizes = [1, 32], strides = [1, 1]} : vector<1x128xf32> to vector<1x32xf32>
    %42 = vector.extract_strided_slice %39 {offsets = [0, 64], sizes = [1, 32], strides = [1, 1]} : vector<1x128xf32> to vector<1x32xf32>
    %43 = vector.extract_strided_slice %38 {offsets = [0, 96], sizes = [1, 32], strides = [1, 1]} : vector<1x128xf32> to vector<1x32xf32>
    %44 = arith.mulf %41, %3 : vector<1x32xf32>
    %45 = arith.mulf %40, %42 : vector<1x32xf32>
    %46 = arith.addf %44, %45 : vector<1x32xf32>
    %47 = math.tanh %46 : vector<1x32xf32>
    %48 = arith.mulf %43, %47 : vector<1x32xf32>
    %c112 = arith.constant 112 : index
    %c0_17 = arith.constant 0 : index
    %49 = vector.load %arg1[%c112, %c0_17] : memref<168x128xf32, #tpu.memory_space<vmem>>, vector<32x128xf32>
    %cst_18 = arith.constant dense<0.000000e+00> : vector<1x128xf32>
    %50 = tpu.matmul %48, %49, %cst_18 {dimension_numbers = #tpu.dot_dimension_numbers<[1], [0], [0], [1], [0, 0, 1, 1], [], []>} : vector<1x32xf32>, vector<32x128xf32>, vector<1x128xf32> -> vector<1x128xf32>
    %c160 = arith.constant 160 : index
    %c0_19 = arith.constant 0 : index
    %51 = vector.load %arg1[%c160, %c0_19] : memref<168x128xf32, #tpu.memory_space<vmem>>, vector<1x128xf32>
    %52 = arith.addf %50, %51 : vector<1x128xf32>
    %c0_20 = arith.constant 0 : index
    %c0_21 = arith.constant 0 : index
    %53 = vector.load %arg2[%c0_20, %c0_21] : memref<1x256xf32, #tpu.memory_space<vmem>>, vector<1x32xf32>
    tpu.vector_store %arg2[%c0_20, %c0_21], %26 {strides = array<i32>} : memref<1x256xf32, #tpu.memory_space<vmem>>, vector<1x32xf32>,
    %c0_22 = arith.constant 0 : index
    %c32_23 = arith.constant 32 : index
    %54 = vector.load %arg2[%c0_22, %c32_23] : memref<1x256xf32, #tpu.memory_space<vmem>>, vector<1x32xf32>
    tpu.vector_store %arg2[%c0_22, %c32_23], %48 {strides = array<i32>} : memref<1x256xf32, #tpu.memory_space<vmem>>, vector<1x32xf32>,
    %c0_24 = arith.constant 0 : index
    %c64_25 = arith.constant 64 : index
    %55 = vector.load %arg2[%c0_24, %c64_25] : memref<1x256xf32, #tpu.memory_space<vmem>>, vector<1x32xf32>
    tpu.vector_store %arg2[%c0_24, %c64_25], %24 {strides = array<i32>} : memref<1x256xf32, #tpu.memory_space<vmem>>, vector<1x32xf32>,
    %c0_26 = arith.constant 0 : index
    %c96_27 = arith.constant 96 : index
    %56 = vector.load %arg2[%c0_26, %c96_27] : memref<1x256xf32, #tpu.memory_space<vmem>>, vector<1x32xf32>
    tpu.vector_store %arg2[%c0_26, %c96_27], %46 {strides = array<i32>} : memref<1x256xf32, #tpu.memory_space<vmem>>, vector<1x32xf32>,
    %c0_28 = arith.constant 0 : index
    %c128_29 = arith.constant 128 : index
    %57 = vector.load %arg2[%c0_28, %c128_29] : memref<1x256xf32, #tpu.memory_space<vmem>>, vector<1x128xf32>
    tpu.vector_store %arg2[%c0_28, %c128_29], %52 {strides = array<i32>} : memref<1x256xf32, #tpu.memory_space<vmem>>, vector<1x128xf32>,
    return
  }
}

</mosaic_0001>

<llo_original>
// kernel: lstm_testobj_forward.1
$region0: #{lstm_testobj_forward.1}
  #allocation0 [shape = 'u32[]', space=smem, size = 0x4, offset = 0x4, fixed_abs, tag = 'smem constant byte address 0x4 - core index']
  #allocation1 [shape = 'u32[144,128]{1,0:T(1,128)}', space=vmem, size = 0x12000, scoped, tag = 'internal scratch']
  %s0 = inlined_call_operand.vmem [shape: f32[1,256], index: 0, kind: input, shape index: {}, may-alias: {0,2}]
  %s1 = inlined_call_operand.hbm [shape: f32[168,128], index: 1, kind: input, shape index: {}]
  %s2 = inlined_call_operand.vmem [shape: f32[1,256], index: 2, kind: output, shape index: {}, may-alias: {0,2}]
  %s3 = sld [smem:[#allocation0]]
  $region22: #{lstm_testobj_forward.1} parent=0
    _
  %s5 = ssub.s32 1, %s3
  %s6 = scalar_select 0, %s5, %s3
  $region1: #{lstm_testobj_forward.1} parent=0
    #allocation2 [shape = 'u8[86016]{0}', space=vmem, size = 0x15000, scoped, tag = 'input window, operand 1, single buffered']
    #allocation3 [shape = 's32[1]{0}', space=sflag, size = 0x4, scoped, tag = 'scoped memory for lstm_testobj_forward.1']
    %7 = vsyncpa [#allocation3], 0
    // Predicated region
    $region2: #{lstm_testobj_forward.1} parent=1 // pred_check
      _
    $region3: #{lstm_testobj_forward.1} parent=1 // pred_check_branch
      %9 = sbr.rel (0) target = $region5
    $region4: #{lstm_testobj_forward.1} parent=1 // pred_region
      _
    $region5: #{lstm_testobj_forward.1} parent=1 // pred_fallthru
      _
    // Predicated region
    $region6: #{lstm_testobj_forward.1} parent=1 // pred_check
      _
    $region7: #{lstm_testobj_forward.1} parent=1 // pred_check_branch
      %11 = sbr.rel (0) target = $region9
    $region8: #{lstm_testobj_forward.1} parent=1 // pred_region
      %s13 = ssub.s32 2688, 2688
      %14 = vsyncadd [#allocation3], %s13
      %s15 = sshll.u32 [#allocation2], 4
      %s16 = int_to_ptr.vmem [resolvable:$true] %s15
      %21 = dma.hbm_to_vmem [thread:$0]  %s1, 2688, %s16, [#allocation3], 128, 128, 8
    $region9: #{lstm_testobj_forward.1} parent=1 // pred_fallthru
      _
    // Predicated region
    $region10: #{lstm_testobj_forward.1} parent=1 // pred_check
      _
    $region11: #{lstm_testobj_forward.1} parent=1 // pred_check_branch
      %23 = sbr.rel (0) target = $region13
    $region12: #{lstm_testobj_forward.1} parent=1 // pred_region
      %24 = dma.done [#allocation3], 2688
    $region13: #{lstm_testobj_forward.1} parent=1 // pred_fallthru
      _
    %v25 = vld [vmem:[%s0] sm:$0x1]
    %v26 = vld [vmem:[%s0 + $0x1] sm:$0x1]
    %v27 = vld [vmem:[#allocation2] sm:$0xff]
    %v28 = vld [vmem:[#allocation2 + $0x8] sm:$0xff]
    %v29 = vld [vmem:[#allocation2 + $0x10] sm:$0xff]
    %v30 = vld [vmem:[#allocation2 + $0x18] sm:$0xff]
    %v31 = vld [vmem:[#allocation2 + $0x20] sm:$0xff]
    %v32 = vld [vmem:[#allocation2 + $0x28] sm:$0xff]
    %vm33 = vcmask 261120
    %v35 = vsel %vm33, %v25, 0
    %37 = vmatprep.subr.mxu0 0.0
    %38 = vmatpush1.msra.mxu0 0.0
    %39 = vmatprep.subr.mxu0 0.0
    %40 = vmatpush1.msra.mxu0 0.0
    %41 = vmatprep.subr.mxu0 0.0
    %42 = vmatpush1.msra.mxu0 0.0
    %43 = vmatprep.subr.mxu0 0.0
    %44 = vmatpush1.msra.mxu0 0.0
    %45 = vmatprep.subr.mxu0 0.0
    %46 = vmatpush1.msra.mxu0 0.0
    %47 = vmatprep.subr.mxu0 0.0
    %48 = vmatpush1.msra.mxu0 0.0
    %49 = vmatprep.subr.mxu0 0.0
    %50 = vmatpush1.msra.mxu0 0.0
    %51 = vmatprep.subr.mxu0 0.0
    %52 = vmatpush1.msra.mxu0 0.0
    %53 = vmatprep.subr.mxu0 0.0
    %54 = vmatpush1.msra.mxu0 0.0
    %55 = vmatprep.subr.mxu0 0.0
    %56 = vmatpush1.msra.mxu0 0.0
    %57 = vmatprep.subr.mxu0 0.0
    %58 = vmatpush1.msra.mxu0 0.0
    %59 = vmatprep.subr.mxu0 0.0
    %60 = vmatpush1.msra.mxu0 0.0
    %61 = vmatprep.subr.mxu0 0.0
    %62 = vmatpush1.msra.mxu0 %v32
    %63 = vmatprep.subr.mxu0 0.0
    %64 = vmatpush1.msra.mxu0 %v31
    %65 = vmatprep.subr.mxu0 0.0
    %66 = vmatpush1.msra.mxu0 %v30
    %67 = vmatprep.subr.mxu0 0.0
    %68 = vmatpush1.msra.mxu0 %v29
    %69 = vmatprep.subr.mxu0 0.0
    %70 = vmatpush2.msra.mxu0 0.0
    %71 = vmatprep.subr.mxu0 0.0
    %72 = vmatpush2.msra.mxu0 0.0
    %73 = vmatprep.subr.mxu0 0.0
    %74 = vmatpush2.msra.mxu0 0.0
    %75 = vmatprep.subr.mxu0 0.0
    %76 = vmatpush2.msra.mxu0 0.0
    %77 = vmatprep.subr.mxu0 0.0
    %78 = vmatpush2.msra.mxu0 0.0
    %79 = vmatprep.subr.mxu0 0.0
    %80 = vmatpush2.msra.mxu0 0.0
    %81 = vmatprep.subr.mxu0 0.0
    %82 = vmatpush2.msra.mxu0 0.0
    %83 = vmatprep.subr.mxu0 0.0
    %84 = vmatpush2.msra.mxu0 0.0
    %85 = vmatprep.subr.mxu0 0.0
    %86 = vmatpush2.msra.mxu0 0.0
    %87 = vmatprep.subr.mxu0 0.0
    %88 = vmatpush2.msra.mxu0 0.0
    %89 = vmatprep.subr.mxu0 0.0
    %90 = vmatpush2.msra.mxu0 0.0
    %91 = vmatprep.subr.mxu0 0.0
    %92 = vmatpush2.msra.mxu0 0.0
    %93 = vmatprep.subr.mxu0 0.0
    %94 = vmatpush2.msra.mxu0 0.0
    %95 = vmatprep.subr.mxu0 0.0
    %96 = vmatpush2.msra.mxu0 0.0
    %97 = vmatprep.subr.mxu0 0.0
    %98 = vmatpush2.msra.mxu0 0.0
    %99 = vmatprep.subr.mxu0 0.0
    %100 = vmatpush2.msra.mxu0 0.0
    %101 = vmatprep.mubr.f32.mxu0 0.0
    %102 = vmatmul.mubr.f32.gmra.mxu0 %v35
    %v103 = vpop.f32.mrf.mxu0
    %v104 = vadd.f32 0.0, %v103
    %v105 = vpop.f32.mrf.mxu0
    %106 = vdwg.mxu0
    %vm107 = vcmask 130048
    %v109 = vsel %vm107, %v26, 0
    %111 = vmatprep.subr.mxu0 0.0
    %112 = vmatpush1.msra.mxu0 0.0
    %113 = vmatprep.subr.mxu0 0.0
    %114 = vmatpush1.msra.mxu0 0.0
    %115 = vmatprep.subr.mxu0 0.0
    %116 = vmatpush1.msra.mxu0 0.0
    %117 = vmatprep.subr.mxu0 0.0
    %118 = vmatpush1.msra.mxu0 0.0
    %119 = vmatprep.subr.mxu0 0.0
    %120 = vmatpush1.msra.mxu0 0.0
    %121 = vmatprep.subr.mxu0 0.0
    %122 = vmatpush1.msra.mxu0 0.0
    %123 = vmatprep.subr.mxu0 0.0
    %124 = vmatpush1.msra.mxu0 0.0
    %125 = vmatprep.subr.mxu0 0.0
    %126 = vmatpush1.msra.mxu0 0.0
    %127 = vmatprep.subr.mxu0 0.0
    %128 = vmatpush1.msra.mxu0 0.0
    %129 = vmatprep.subr.mxu0 0.0
    %130 = vmatpush1.msra.mxu0 0.0
    %131 = vmatprep.subr.mxu0 0.0
    %132 = vmatpush1.msra.mxu0 0.0
    %133 = vmatprep.subr.mxu0 0.0
    %134 = vmatpush1.msra.mxu0 0.0
    %135 = vmatprep.subr.mxu0 0.0
    %136 = vmatpush1.msra.mxu0 0.0
    %137 = vmatprep.subr.mxu0 0.0
    %138 = vmatpush1.msra.mxu0 0.0
    %139 = vmatprep.subr.mxu0 0.0
    %140 = vmatpush1.msra.mxu0 %v28
    %141 = vmatprep.subr.mxu0 0.0
    %142 = vmatpush1.msra.mxu0 %v27
    %143 = vmatprep.subr.mxu0 0.0
    %144 = vmatpush2.msra.mxu0 0.0
    %145 = vmatprep.subr.mxu0 0.0
    %146 = vmatpush2.msra.mxu0 0.0
    %147 = vmatprep.subr.mxu0 0.0
    %148 = vmatpush2.msra.mxu0 0.0
    %149 = vmatprep.subr.mxu0 0.0
    %150 = vmatpush2.msra.mxu0 0.0
    %151 = vmatprep.subr.mxu0 0.0
    %152 = vmatpush2.msra.mxu0 0.0
    %153 = vmatprep.subr.mxu0 0.0
    %154 = vmatpush2.msra.mxu0 0.0
    %155 = vmatprep.subr.mxu0 0.0
    %156 = vmatpush2.msra.mxu0 0.0
    %157 = vmatprep.subr.mxu0 0.0
    %158 = vmatpush2.msra.mxu0 0.0
    %159 = vmatprep.subr.mxu0 0.0
    %160 = vmatpush2.msra.mxu0 0.0
    %161 = vmatprep.subr.mxu0 0.0
    %162 = vmatpush2.msra.mxu0 0.0
    %163 = vmatprep.subr.mxu0 0.0
    %164 = vmatpush2.msra.mxu0 0.0
    %165 = vmatprep.subr.mxu0 0.0
    %166 = vmatpush2.msra.mxu0 0.0
    %167 = vmatprep.subr.mxu0 0.0
    %168 = vmatpush2.msra.mxu0 0.0
    %169 = vmatprep.subr.mxu0 0.0
    %170 = vmatpush2.msra.mxu0 0.0
    %171 = vmatprep.subr.mxu0 0.0
    %172 = vmatpush2.msra.mxu0 0.0
    %173 = vmatprep.subr.mxu0 0.0
    %174 = vmatpush2.msra.mxu0 0.0
    %175 = vmatprep.mubr.f32.mxu0 0.0
    %176 = vmatmul.mubr.f32.gmra.mxu0 %v109
    %v177 = vpop.f32.mrf.mxu0
    %v178 = vadd.f32 %v104, %v177
    %v179 = vpop.f32.mrf.mxu0
    %180 = vdwg.mxu0
    %v181 = vld [vmem:[#allocation2 + $0x90] sm:$0x1]
    %v182 = vadd.f32 %v178, %v181
    %v183 = vxor.u32 %v182, 2147483648
    %v184 = vmul.f32 %v183, 1.442695
    %v185 = vpow.pop %v184
    %v186 = vadd.f32 %v185, 1.0
    %v187 = vrcp.pop %v186
    %v188 = vmul.f32 1.0, %v187
    %v189 = vtanh.pop %v182
    %v190 = vlaneseq
    %v191 = vshrl.u32 %v190, 7
    %v192 = vsub.s32 0, %v191
    %v193 = vrot.slane %v25, %v192
    %194 = vrot.lane.b32.xlu0 %v193, 96
    %v195 = vpop.permute.xlu0 %194
    %v197 = vmul.f32 %v188, %v195
    %199 = vrot.lane.b32.xlu0 %v189, 64
    %v200 = vpop.permute.xlu0 %199
    %v202 = vmul.f32 %v188, %v200
    %204 = vrot.lane.b32.xlu0 %v202, 32
    %v205 = vpop.permute.xlu0 %204
    %v207 = vadd.f32 %v197, %v205
    %v208 = vtanh.pop %v207
    %210 = vrot.lane.b32.xlu0 %v208, 64
    %v211 = vpop.permute.xlu0 %210
    %v213 = vmul.f32 %v188, %v211
    %v214 = vld [vmem:[#allocation2 + $0x30] sm:$0xff]
    %v215 = vld [vmem:[#allocation2 + $0x38] sm:$0xff]
    %v216 = vld [vmem:[#allocation2 + $0x40] sm:$0xff]
    %v217 = vld [vmem:[#allocation2 + $0x48] sm:$0xff]
    %v218 = vld [vmem:[#allocation2 + $0x50] sm:$0xff]
    %v219 = vld [vmem:[#allocation2 + $0x58] sm:$0xff]
    %v220 = vld [vmem:[#allocation2 + $0x60] sm:$0xff]
    %v221 = vld [vmem:[#allocation2 + $0x68] sm:$0xff]
    %v222 = vsel %vm33, %v195, 0
    %224 = vmatprep.subr.mxu0 0.0
    %225 = vmatpush1.msra.mxu0 0.0
    %226 = vmatprep.subr.mxu0 0.0
    %227 = vmatpush1.msra.mxu0 0.0
    %228 = vmatprep.subr.mxu0 0.0
    %229 = vmatpush1.msra.mxu0 0.0
    %230 = vmatprep.subr.mxu0 0.0
    %231 = vmatpush1.msra.mxu0 0.0
    %232 = vmatprep.subr.mxu0 0.0
    %233 = vmatpush1.msra.mxu0 0.0
    %234 = vmatprep.subr.mxu0 0.0
    %235 = vmatpush1.msra.mxu0 0.0
    %236 = vmatprep.subr.mxu0 0.0
    %237 = vmatpush1.msra.mxu0 0.0
    %238 = vmatprep.subr.mxu0 0.0
    %239 = vmatpush1.msra.mxu0 0.0
    %240 = vmatprep.subr.mxu0 0.0
    %241 = vmatpush1.msra.mxu0 0.0
    %242 = vmatprep.subr.mxu0 0.0
    %243 = vmatpush1.msra.mxu0 0.0
    %244 = vmatprep.subr.mxu0 0.0
    %245 = vmatpush1.msra.mxu0 0.0
    %246 = vmatprep.subr.mxu0 0.0
    %247 = vmatpush1.msra.mxu0 0.0
    %248 = vmatprep.subr.mxu0 0.0
    %249 = vmatpush1.msra.mxu0 %v221
    %250 = vmatprep.subr.mxu0 0.0
    %251 = vmatpush1.msra.mxu0 %v220
    %252 = vmatprep.subr.mxu0 0.0
    %253 = vmatpush1.msra.mxu0 %v219
    %254 = vmatprep.subr.mxu0 0.0
    %255 = vmatpush1.msra.mxu0 %v218
    %256 = vmatprep.subr.mxu0 0.0
    %257 = vmatpush2.msra.mxu0 0.0
    %258 = vmatprep.subr.mxu0 0.0
    %259 = vmatpush2.msra.mxu0 0.0
    %260 = vmatprep.subr.mxu0 0.0
    %261 = vmatpush2.msra.mxu0 0.0
    %262 = vmatprep.subr.mxu0 0.0
    %263 = vmatpush2.msra.mxu0 0.0
    %264 = vmatprep.subr.mxu0 0.0
    %265 = vmatpush2.msra.mxu0 0.0
    %266 = vmatprep.subr.mxu0 0.0
    %267 = vmatpush2.msra.mxu0 0.0
    %268 = vmatprep.subr.mxu0 0.0
    %269 = vmatpush2.msra.mxu0 0.0
    %270 = vmatprep.subr.mxu0 0.0
    %271 = vmatpush2.msra.mxu0 0.0
    %272 = vmatprep.subr.mxu0 0.0
    %273 = vmatpush2.msra.mxu0 0.0
    %274 = vmatprep.subr.mxu0 0.0
    %275 = vmatpush2.msra.mxu0 0.0
    %276 = vmatprep.subr.mxu0 0.0
    %277 = vmatpush2.msra.mxu0 0.0
    %278 = vmatprep.subr.mxu0 0.0
    %279 = vmatpush2.msra.mxu0 0.0
    %280 = vmatprep.subr.mxu0 0.0
    %281 = vmatpush2.msra.mxu0 0.0
    %282 = vmatprep.subr.mxu0 0.0
    %283 = vmatpush2.msra.mxu0 0.0
    %284 = vmatprep.subr.mxu0 0.0
    %285 = vmatpush2.msra.mxu0 0.0
    %286 = vmatprep.subr.mxu0 0.0
    %287 = vmatpush2.msra.mxu0 0.0
    %288 = vmatprep.mubr.f32.mxu0 0.0
    %289 = vmatmul.mubr.f32.gmra.mxu0 %v222
    %v290 = vpop.f32.mrf.mxu0
    %v291 = vadd.f32 0.0, %v290
    %v292 = vpop.f32.mrf.mxu0
    %293 = vdwg.mxu0
    %295 = vrot.lane.b32.xlu0 %v213, 32
    %v296 = vpop.permute.xlu0 %295
    %v297 = vsel %vm33, %v296, 0
    %299 = vmatprep.subr.mxu0 0.0
    %300 = vmatpush1.msra.mxu0 0.0
    %301 = vmatprep.subr.mxu0 0.0
    %302 = vmatpush1.msra.mxu0 0.0
    %303 = vmatprep.subr.mxu0 0.0
    %304 = vmatpush1.msra.mxu0 0.0
    %305 = vmatprep.subr.mxu0 0.0
    %306 = vmatpush1.msra.mxu0 0.0
    %307 = vmatprep.subr.mxu0 0.0
    %308 = vmatpush1.msra.mxu0 0.0
    %309 = vmatprep.subr.mxu0 0.0
    %310 = vmatpush1.msra.mxu0 0.0
    %311 = vmatprep.subr.mxu0 0.0
    %312 = vmatpush1.msra.mxu0 0.0
    %313 = vmatprep.subr.mxu0 0.0
    %314 = vmatpush1.msra.mxu0 0.0
    %315 = vmatprep.subr.mxu0 0.0
    %316 = vmatpush1.msra.mxu0 0.0
    %317 = vmatprep.subr.mxu0 0.0
    %318 = vmatpush1.msra.mxu0 0.0
    %319 = vmatprep.subr.mxu0 0.0
    %320 = vmatpush1.msra.mxu0 0.0
    %321 = vmatprep.subr.mxu0 0.0
    %322 = vmatpush1.msra.mxu0 0.0
    %323 = vmatprep.subr.mxu0 0.0
    %324 = vmatpush1.msra.mxu0 %v217
    %325 = vmatprep.subr.mxu0 0.0
    %326 = vmatpush1.msra.mxu0 %v216
    %327 = vmatprep.subr.mxu0 0.0
    %328 = vmatpush1.msra.mxu0 %v215
    %329 = vmatprep.subr.mxu0 0.0
    %330 = vmatpush1.msra.mxu0 %v214
    %331 = vmatprep.subr.mxu0 0.0
    %332 = vmatpush2.msra.mxu0 0.0
    %333 = vmatprep.subr.mxu0 0.0
    %334 = vmatpush2.msra.mxu0 0.0
    %335 = vmatprep.subr.mxu0 0.0
    %336 = vmatpush2.msra.mxu0 0.0
    %337 = vmatprep.subr.mxu0 0.0
    %338 = vmatpush2.msra.mxu0 0.0
    %339 = vmatprep.subr.mxu0 0.0
    %340 = vmatpush2.msra.mxu0 0.0
    %341 = vmatprep.subr.mxu0 0.0
    %342 = vmatpush2.msra.mxu0 0.0
    %343 = vmatprep.subr.mxu0 0.0
    %344 = vmatpush2.msra.mxu0 0.0
    %345 = vmatprep.subr.mxu0 0.0
    %346 = vmatpush2.msra.mxu0 0.0
    %347 = vmatprep.subr.mxu0 0.0
    %348 = vmatpush2.msra.mxu0 0.0
    %349 = vmatprep.subr.mxu0 0.0
    %350 = vmatpush2.msra.mxu0 0.0
    %351 = vmatprep.subr.mxu0 0.0
    %352 = vmatpush2.msra.mxu0 0.0
    %353 = vmatprep.subr.mxu0 0.0
    %354 = vmatpush2.msra.mxu0 0.0
    %355 = vmatprep.subr.mxu0 0.0
    %356 = vmatpush2.msra.mxu0 0.0
    %357 = vmatprep.subr.mxu0 0.0
    %358 = vmatpush2.msra.mxu0 0.0
    %359 = vmatprep.subr.mxu0 0.0
    %360 = vmatpush2.msra.mxu0 0.0
    %361 = vmatprep.subr.mxu0 0.0
    %362 = vmatpush2.msra.mxu0 0.0
    %363 = vmatprep.mubr.f32.mxu0 0.0
    %364 = vmatmul.mubr.f32.gmra.mxu0 %v297
    %v365 = vpop.f32.mrf.mxu0
    %v366 = vadd.f32 %v291, %v365
    %v367 = vpop.f32.mrf.mxu0
    %368 = vdwg.mxu0
    %v369 = vld [vmem:[#allocation2 + $0x98] sm:$0x1]
    %v370 = vadd.f32 %v366, %v369
    %v371 = vxor.u32 %v370, 2147483648
    %v372 = vmul.f32 %v371, 1.442695
    %v373 = vpow.pop %v372
    %v374 = vadd.f32 %v373, 1.0
    %v375 = vrcp.pop %v374
    %v376 = vmul.f32 1.0, %v375
    %v377 = vtanh.pop %v370
    %378 = vrot.lane.b32.xlu0 %v193, 64
    %v379 = vpop.permute.xlu0 %378
    %v381 = vmul.f32 %v376, %v379
    %383 = vrot.lane.b32.xlu0 %v377, 64
    %v384 = vpop.permute.xlu0 %383
    %v386 = vmul.f32 %v376, %v384
    %388 = vrot.lane.b32.xlu0 %v386, 32
    %v389 = vpop.permute.xlu0 %388
    %v391 = vadd.f32 %v381, %v389
    %v392 = vtanh.pop %v391
    %394 = vrot.lane.b32.xlu0 %v392, 64
    %v395 = vpop.permute.xlu0 %394
    %v397 = vmul.f32 %v376, %v395
    %v398 = vld [vmem:[#allocation2 + $0x70] sm:$0xff]
    %v399 = vld [vmem:[#allocation2 + $0x78] sm:$0xff]
    %v400 = vld [vmem:[#allocation2 + $0x80] sm:$0xff]
    %v401 = vld [vmem:[#allocation2 + $0x88] sm:$0xff]
    %v402 = vld [vmem:[#allocation2 + $0xa0] sm:$0x1]
    %404 = vrot.lane.b32.xlu0 %v397, 32
    %v405 = vpop.permute.xlu0 %404
    %v406 = vsel %vm33, %v405, 0
    %408 = vmatprep.subr.mxu0 0.0
    %409 = vmatpush1.msra.mxu0 0.0
    %410 = vmatprep.subr.mxu0 0.0
    %411 = vmatpush1.msra.mxu0 0.0
    %412 = vmatprep.subr.mxu0 0.0
    %413 = vmatpush1.msra.mxu0 0.0
    %414 = vmatprep.subr.mxu0 0.0
    %415 = vmatpush1.msra.mxu0 0.0
    %416 = vmatprep.subr.mxu0 0.0
    %417 = vmatpush1.msra.mxu0 0.0
    %418 = vmatprep.subr.mxu0 0.0
    %419 = vmatpush1.msra.mxu0 0.0
    %420 = vmatprep.subr.mxu0 0.0
    %421 = vmatpush1.msra.mxu0 0.0
    %422 = vmatprep.subr.mxu0 0.0
    %423 = vmatpush1.msra.mxu0 0.0
    %424 = vmatprep.subr.mxu0 0.0
    %425 = vmatpush1.msra.mxu0 0.0
    %426 = vmatprep.subr.mxu0 0.0
    %427 = vmatpush1.msra.mxu0 0.0
    %428 = vmatprep.subr.mxu0 0.0
    %429 = vmatpush1.msra.mxu0 0.0
    %430 = vmatprep.subr.mxu0 0.0
    %431 = vmatpush1.msra.mxu0 0.0
    %432 = vmatprep.subr.mxu0 0.0
    %433 = vmatpush1.msra.mxu0 %v401
    %434 = vmatprep.subr.mxu0 0.0
    %435 = vmatpush1.msra.mxu0 %v400
    %436 = vmatprep.subr.mxu0 0.0
    %437 = vmatpush1.msra.mxu0 %v399
    %438 = vmatprep.subr.mxu0 0.0
    %439 = vmatpush1.msra.mxu0 %v398
    %440 = vmatprep.subr.mxu0 0.0
    %441 = vmatpush2.msra.mxu0 0.0
    %442 = vmatprep.subr.mxu0 0.0
    %443 = vmatpush2.msra.mxu0 0.0
    %444 = vmatprep.subr.mxu0 0.0
    %445 = vmatpush2.msra.mxu0 0.0
    %446 = vmatprep.subr.mxu0 0.0
    %447 = vmatpush2.msra.mxu0 0.0
    %448 = vmatprep.subr.mxu0 0.0
    %449 = vmatpush2.msra.mxu0 0.0
    %450 = vmatprep.subr.mxu0 0.0
    %451 = vmatpush2.msra.mxu0 0.0
    %452 = vmatprep.subr.mxu0 0.0
    %453 = vmatpush2.msra.mxu0 0.0
    %454 = vmatprep.subr.mxu0 0.0
    %455 = vmatpush2.msra.mxu0 0.0
    %456 = vmatprep.subr.mxu0 0.0
    %457 = vmatpush2.msra.mxu0 0.0
    %458 = vmatprep.subr.mxu0 0.0
    %459 = vmatpush2.msra.mxu0 0.0
    %460 = vmatprep.subr.mxu0 0.0
    %461 = vmatpush2.msra.mxu0 0.0
    %462 = vmatprep.subr.mxu0 0.0
    %463 = vmatpush2.msra.mxu0 0.0
    %464 = vmatprep.subr.mxu0 0.0
    %465 = vmatpush2.msra.mxu0 0.0
    %466 = vmatprep.subr.mxu0 0.0
    %467 = vmatpush2.msra.mxu0 0.0
    %468 = vmatprep.subr.mxu0 0.0
    %469 = vmatpush2.msra.mxu0 0.0
    %470 = vmatprep.subr.mxu0 0.0
    %471 = vmatpush2.msra.mxu0 0.0
    %472 = vmatprep.mubr.f32.mxu0 0.0
    %473 = vmatmul.mubr.f32.gmra.mxu0 %v406
    %v474 = vpop.f32.mrf.mxu0
    %v475 = vadd.f32 %v402, %v474
    %v476 = vpop.f32.mrf.mxu0
    %477 = vdwg.mxu0
    %v479 = vunpack.c.l.s4 1966171168
    %v480 = vunpack.c.0.s8 %v479
    %v481 = vlaneseq
    %v482 = vshrl.u32 %v481, 7
    %v483 = vsub.s32 %v480, %v482
    %v484 = vrot.slane %v213, %v483
    %v486 = vunpack.c.l.s4 1966171168
    %v487 = vunpack.c.0.s8 %v486
    %v488 = vlaneseq
    %v489 = vshrl.u32 %v488, 7
    %v490 = vsub.s32 %v487, %v489
    %v491 = vrot.slane %v484, %v490
    %492 = vrot.lane.b32.xlu0 %v491, 32
    %v493 = vpop.permute.xlu0 %492
    %v495 = vlaneseq
    %vm496 = vcmp.ge.s32.totalorder %v495, 0
    %vm497 = vcmp.lt.s32.totalorder %v495, 32
    %vm498 = vmand %vm496, %vm497
    %499 = vst.msk [vmem:[%s2] sm:$0x1] %vm498, %v493
    %v501 = vunpack.c.l.s4 1966171168
    %v502 = vunpack.c.0.s8 %v501
    %v503 = vlaneseq
    %v504 = vshrl.u32 %v503, 7
    %v505 = vsub.s32 %v502, %v504
    %v506 = vrot.slane %v397, %v505
    %v508 = vunpack.c.l.s4 1966171168
    %v509 = vunpack.c.0.s8 %v508
    %v510 = vlaneseq
    %v511 = vshrl.u32 %v510, 7
    %v512 = vsub.s32 %v509, %v511
    %v513 = vrot.slane %v506, %v512
    %514 = vrot.lane.b32.xlu0 %v513, 64
    %v515 = vpop.permute.xlu0 %514
    %vm517 = vcmp.ge.s32.totalorder %v495, 32
    %vm518 = vcmp.lt.s32.totalorder %v495, 64
    %vm519 = vmand %vm517, %vm518
    %520 = vst.msk [vmem:[%s2] sm:$0x1] %vm519, %v515
    %v523 = vunpack.c.l.s4 1966171168
    %v524 = vunpack.c.0.s8 %v523
    %v525 = vlaneseq
    %v526 = vshrl.u32 %v525, 7
    %v527 = vsub.s32 %v524, %v526
    %v528 = vrot.slane %v207, %v527
    %v530 = vunpack.c.l.s4 1966171168
    %v531 = vunpack.c.0.s8 %v530
    %v532 = vlaneseq
    %v533 = vshrl.u32 %v532, 7
    %v534 = vsub.s32 %v531, %v533
    %v535 = vrot.slane %v528, %v534
    %536 = vrot.lane.b32.xlu0 %v535, 32
    %v537 = vpop.permute.xlu0 %536
    %vm539 = vcmp.ge.s32.totalorder %v495, 64
    %vm540 = vcmp.lt.s32.totalorder %v495, 96
    %vm541 = vmand %vm539, %vm540
    %542 = vst.msk [vmem:[%s2] sm:$0x1] %vm541, %v537
    %v545 = vunpack.c.l.s4 1966171168
    %v546 = vunpack.c.0.s8 %v545
    %v547 = vlaneseq
    %v548 = vshrl.u32 %v547, 7
    %v549 = vsub.s32 %v546, %v548
    %v550 = vrot.slane %v391, %v549
    %v552 = vunpack.c.l.s4 1966171168
    %v553 = vunpack.c.0.s8 %v552
    %v554 = vlaneseq
    %v555 = vshrl.u32 %v554, 7
    %v556 = vsub.s32 %v553, %v555
    %v557 = vrot.slane %v550, %v556
    %558 = vrot.lane.b32.xlu0 %v557, 64
    %v559 = vpop.permute.xlu0 %558
    %vm561 = vcmp.ge.s32.totalorder %v495, 96
    %vm562 = vcmp.lt.s32.totalorder %v495, 128
    %vm563 = vmand %vm561, %vm562
    %564 = vst.msk [vmem:[%s2] sm:$0x1] %vm563, %v559
    %vm565 = vmand %vm496, %vm562
    %566 = vst.msk [vmem:[%s2 + $0x1] sm:$0x1] %vm565, %v475
    // Predicated region
    $region14: #{lstm_testobj_forward.1} parent=1 // pred_check
      _
    $region15: #{lstm_testobj_forward.1} parent=1 // pred_check_branch
      %568 = sbr.rel (0) target = $region17
    $region16: #{lstm_testobj_forward.1} parent=1 // pred_region
      _
    $region17: #{lstm_testobj_forward.1} parent=1 // pred_fallthru
      _
    // Predicated region
    $region18: #{lstm_testobj_forward.1} parent=1 // pred_check
      _
    $region19: #{lstm_testobj_forward.1} parent=1 // pred_check_branch
      %570 = sbr.rel (0) target = $region21
    $region20: #{lstm_testobj_forward.1} parent=1 // pred_region
      _
    $region21: #{lstm_testobj_forward.1} parent=1 // pred_fallthru
      _
    %571 = vsyncpa [#allocation3], 1

</llo_original>
